<compile_context>
chip_gen: v7x
topology: tpu7x:2x2x1
jax: 0.10.0
libtpu: 0.0.40
codegen_flags: <defaults>
</compile_context>

<pallas_src>
import math

import jax
import jax.numpy as jnp
from jax.experimental import pallas as pl
from jax.experimental.pallas import tpu as pltpu


def _round_up(x, m):
    return ((x + m - 1) // m) * m


def _vmem_budget_bytes():
    """~75% of per-core VMEM, capped at 100 MiB (v5e/v6e), 48 MiB on v7x."""
    try:
        cap = pltpu.get_tpu_info().vmem_capacity_bytes
    except Exception:
        cap = 64 * 1024 * 1024          # conservative: v7x per-TensorCore VMEM
    return min(int(0.75 * cap), 100 * 1024 * 1024)


# ---------------------------------------------------------------------------
# Kernel 1: support = X @ W   (row-tiled, small)
# ---------------------------------------------------------------------------
def _support_kernel(x_ref, w_ref, s_ref):
    s_ref[...] = jnp.dot(
        x_ref[...], w_ref[...], preferred_element_type=jnp.float32
    ).astype(s_ref.dtype)


# ---------------------------------------------------------------------------
# Kernel 2: out = A @ support (+ bias), grid (row-tiles, k-steps)
#   kids_ref / nnz_ref: scalar-prefetched compacted nonzero k-tile schedule.
# ---------------------------------------------------------------------------
def _make_aggregate_kernel(use_bias, support_resident, nk, tk):
    def kernel(kids_ref, nnz_ref, a_ref, s_ref, *rest):
        if use_bias:
            b_ref, out_ref = rest
        else:
            (out_ref,) = rest

        i = pl.program_id(0)
        t = pl.program_id(1)
        nt = pl.num_programs(1)

        @pl.when(t == 0)
        def _():
            out_ref[...] = jnp.zeros_like(out_ref)

        # Only nonzero adjacency tiles do MXU work; zero tiles were never
        # DMA'd (their block index repeats the previous step's index).
        @pl.when(t < nnz_ref[i])
        def _():
            if support_resident:
                off = pl.multiple_of(kids_ref[i * nk + t] * tk, tk)
                s_tile = s_ref[pl.ds(off, tk), :]
            else:
                s_tile = s_ref[...]
            out_ref[...] += jnp.dot(
                a_ref[...], s_tile, preferred_element_type=jnp.float32)

        # Finalize: bias add on the resident f32 output block.
        @pl.when(t == nt - 1)
        def _():
            if use_bias:
                out_ref[...] += b_ref[...]

    return kernel


# ---------------------------------------------------------------------------
# Wrapper
# ---------------------------------------------------------------------------
def graph_convolution(adjacency, input_feature, weight, bias=None,
                      *, tm=512, tk=1024):
    """GCN layer: adjacency @ (input_feature @ weight) + bias."""
    N, input_dim = input_feature.shape
    assert adjacency.shape == (N, N)
    assert weight.shape[0] == input_dim
    output_dim = weight.shape[1]
    use_bias = bias is not None

    f32, bf16 = jnp.float32, jnp.bfloat16

    # ---- lane-dense output padding ----------------------------------------
    out_pad = max(128, _round_up(output_dim, 128))
    # TODO(synk): if output_dim >> 128 and the kernel ever turns compute-bound
    # on v6e/v7x, add an output-column grid axis tiled at 256.

    # ---- tiling: rows and cols of A padded independently -------------------
    tm = _round_up(min(tm, _round_up(N, 16)), 16)
    # keep >= 2 row tiles so both v7x TensorCores get work
    while tm > 16 and _round_up(N, tm) // tm < 2:
        tm = max(16, _round_up(tm // 2, 16))
    tk = _round_up(min(tk, _round_up(N, 128)), 128)
    assert tm % 16 == 0 and tk % 128 == 0

    n_rows = _round_up(N, tm)
    n_cols = _round_up(N, tk)
    ni, nk = n_rows // tm, n_cols // tk

    # ---- VMEM budget (v7x: 64 MiB per core; v5e/v6e: 128 MiB) ---------------
    vmem_budget = _vmem_budget_bytes()
    support_bytes = n_cols * out_pad * 2                      # bf16
    agg_fixed = 2 * (tm * tk * 2) + 2 * (tm * out_pad * 4) + 2 * out_pad * 4
    support_resident = (2 * support_bytes + agg_fixed) <= int(0.8 * vmem_budget)

    # ---- bf16 streaming operands (f32 accumulation in-kernel) --------------
    a_p = jnp.zeros((n_rows, n_cols), bf16).at[:N, :N].set(adjacency.astype(bf16))
    x_p = jnp.zeros((n_cols, input_dim), bf16).at[:N, :].set(
        input_feature.astype(bf16))
    w_p = jnp.zeros((input_dim, out_pad), bf16).at[:, :output_dim].set(
        weight.astype(bf16))
    if use_bias:
        b_p = jnp.zeros((1, out_pad), f32).at[0, :output_dim].set(
            bias.astype(f32))

    # ---- support = X @ W -----------------------------------------------------
    t1 = math.gcd(tk, 512)       # row tile for the small matmul; divides n_cols
    support = pl.pallas_call(
        _support_kernel,
        out_shape=jax.ShapeDtypeStruct((n_cols, out_pad), bf16),
        grid_spec=pltpu.PrefetchScalarGridSpec(
            num_scalar_prefetch=0,
            grid=(n_cols // t1,),
            in_specs=[
                pl.BlockSpec((t1, input_dim), lambda i: (i, 0)),
                pl.BlockSpec((input_dim, out_pad), lambda i: (0, 0)),
            ],
            out_specs=pl.BlockSpec((t1, out_pad), lambda i: (i, 0)),
        ),
        compiler_params=pltpu.CompilerParams(
            dimension_semantics=("parallel",),
            vmem_limit_bytes=vmem_budget,
        ),
        cost_estimate=pl.CostEstimate(
            flops=2 * n_cols * input_dim * out_pad,
            transcendentals=0,
            bytes_accessed=x_p.size * 2 + w_p.size * 2 + n_cols * out_pad * 2,
        ),
    )(x_p, w_p)

    # ---- tile-level sparsity: compacted nonzero k-tile ids per row tile -----
    # Derived straight from the padded bf16 array (no f32 copy of A).
    blk_nz = jnp.any(a_p.reshape(ni, tm, nk, tk) != 0, axis=(1, 3))   # (ni, nk)
    nnz = jnp.sum(blk_nz, axis=1).astype(jnp.int32)                   # (ni,)
    order = jnp.argsort(jnp.where(blk_nz, 0, 1), axis=1).astype(jnp.int32)
    last = jnp.take_along_axis(order, jnp.maximum(nnz - 1, 0)[:, None], axis=1)
    pos = jnp.arange(nk, dtype=jnp.int32)[None, :]
    # Positions t >= nnz[i] repeat the last valid k-tile index -> unchanged
    # block index -> Pallas elides the DMA; pl.when skips the matmul.
    kids = jnp.where(pos < nnz[:, None], order, last).reshape(-1)     # (ni*nk,)

    # ---- out = A @ support (+ bias) ------------------------------------------
    def a_map(i, t, kids_ref, nnz_ref):
        return (i, kids_ref[i * nk + t])

    in_specs = [pl.BlockSpec((tm, tk), a_map)]
    # TODO(synk): pipeline_mode=pl.Buffered(3) on the A spec could hide DMA
    # jitter from the uneven per-step compute; left at the default depth.
    if support_resident:
        in_specs.append(
            pl.BlockSpec((n_cols, out_pad),
                         lambda i, t, kids_ref, nnz_ref: (0, 0)))
    else:
        in_specs.append(
            pl.BlockSpec((tk, out_pad),
                         lambda i, t, kids_ref, nnz_ref: (kids_ref[i * nk + t], 0)))
    operands = [a_p, support]
    if use_bias:
        in_specs.append(
            pl.BlockSpec((1, out_pad), lambda i, t, kids_ref, nnz_ref: (0, 0)))
        operands.append(b_p)

    out_p = pl.pallas_call(
        _make_aggregate_kernel(use_bias, support_resident, nk, tk),
        out_shape=jax.ShapeDtypeStruct((n_rows, out_pad), f32),
        grid_spec=pltpu.PrefetchScalarGridSpec(
            num_scalar_prefetch=2,
            grid=(ni, nk),
            in_specs=in_specs,
            out_specs=pl.BlockSpec((tm, out_pad),
                                   lambda i, t, kids_ref, nnz_ref: (i, 0)),
        ),
        compiler_params=pltpu.CompilerParams(
            dimension_semantics=("parallel", "arbitrary"),
            vmem_limit_bytes=vmem_budget,
        ),
        cost_estimate=pl.CostEstimate(
            flops=2 * n_rows * n_cols * out_pad,
            transcendentals=0,
            bytes_accessed=(a_p.size * 2 + n_cols * out_pad * 2
                            + n_rows * out_pad * 4
                            + (out_pad * 4 if use_bias else 0)),
        ),
    )(kids, nnz, *operands)

    return out_p[:N, :output_dim]


def init_params(key, input_dim, output_dim, use_bias=True):
    """Mimics nn.init.kaiming_uniform_ (a=0, fan_in=weight.size(1)) + zero bias."""
    gain = math.sqrt(2.0)
    fan_in = output_dim                      # torch fan_in for a (in, out) 2-D tensor
    bound = gain * math.sqrt(3.0 / fan_in)
    weight = jax.random.uniform(key, (input_dim, output_dim),
                                minval=-bound, maxval=bound, dtype=jnp.float32)
    bias = jnp.zeros((output_dim,), dtype=jnp.float32) if use_bias else None
    return weight, bias


if __name__ == "__main__":
    N, input_dim, output_dim = 256, 32, 16

    key = jax.random.PRNGKey(0)
    k_w, k_x, k_a1, k_a2 = jax.random.split(key, 4)

    weight, bias = init_params(k_w, input_dim, output_dim, use_bias=True)
    x = jax.random.normal(k_x, (N, input_dim), dtype=jnp.float32)

    # Two disconnected 128-node communities -> block-diagonal adjacency; with
    # tm=tk=128 the off-diagonal 128x128 tiles are all-zero, exercising the
    # scalar-prefetch DMA-skip path in the aggregate kernel.
    half = N // 2

    def community(k, n):
        a = (jax.random.uniform(k, (n, n)) < 0.1).astype(jnp.float32)
        return jnp.maximum(a, a.T) + jnp.eye(n, dtype=jnp.float32)

    a_sym = jnp.zeros((N, N), jnp.float32)
    a_sym = a_sym.at[:half, :half].set(community(k_a1, half))
    a_sym = a_sym.at[half:, half:].set(community(k_a2, half))
    deg = jnp.sum(a_sym, axis=1)
    d_inv_sqrt = 1.0 / jnp.sqrt(deg)
    adjacency = a_sym * d_inv_sqrt[:, None] * d_inv_sqrt[None, :]

    # jit the wrapper so padding + mask construction fuse with the kernels.
    gcn = jax.jit(lambda a, xf, w, b: graph_convolution(a, xf, w, b,
                                                        tm=128, tk=128))
    out = jax.block_until_ready(gcn(adjacency, x, weight, bias))
    assert out.shape == (N, output_dim)

    # Reference with the same bf16 input quantization as the kernel path.
    # (Full-f32 fidelity would require streaming A / support in f32.)
    a32 = adjacency.astype(jnp.bfloat16).astype(jnp.float32)
    x32 = x.astype(jnp.bfloat16).astype(jnp.float32)
    w32 = weight.astype(jnp.bfloat16).astype(jnp.float32)
    support_ref = (x32 @ w32).astype(jnp.bfloat16).astype(jnp.float32)
    ref = a32 @ support_ref + bias[None, :]
    err = float(jnp.max(jnp.abs(out - ref)))
    assert jnp.allclose(out, ref, atol=1e-2, rtol=1e-2), err

    print("KERNEL_OK")
</pallas_src>

<mosaic_0001>
module attributes {stable_mosaic.version = 11 : i64} {
  func.func @kernel(%arg0: i32, %arg1: i32, %arg2: memref<4xi32, #tpu.memory_space<smem>>, %arg3: memref<2xi32, #tpu.memory_space<smem>>, %arg4: memref<128x128xbf16, #tpu.memory_space<vmem>>, %arg5: memref<256x128xbf16, #tpu.memory_space<vmem>>, %arg6: memref<1x128xf32, #tpu.memory_space<vmem>>, %arg7: memref<128x128xf32, #tpu.memory_space<vmem>>) attributes {dimension_semantics = [#tpu.dimension_semantics<parallel>, #tpu.dimension_semantics<arbitrary>], iteration_bounds = array<i64: 2, 2>, scalar_prefetch = 2 : i64, scratch_operands = 0 : i64, tpu.core_type = #tpu.core_type<tc>, window_params = [{transform_indices = @transform_0, window_bounds = array<i64: 128, 128>}, {pipeline_mode = #tpu.pipeline_mode<synchronous>, transform_indices = @transform_1, window_bounds = array<i64: 256, 128>}, {pipeline_mode = #tpu.pipeline_mode<synchronous>, transform_indices = @transform_2, window_bounds = array<i64: 1, 128>}, {transform_indices = @transform_3, window_bounds = array<i64: 128, 128>}]} {
    %c0_i32 = arith.constant 0 : i32
    %0 = arith.cmpi eq, %arg1, %c0_i32 : i32
    %1 = arith.extui %0 : i1 to i32
    %c0_i32_0 = arith.constant 0 : i32
    %2 = arith.cmpi ne, %1, %c0_i32_0 : i32
    scf.if %2 {
      %cst = arith.constant 0.000000e+00 : f32
      %11 = vector.broadcast %cst : f32 to vector<128x128xf32>
      %c0 = arith.constant 0 : index
      %c0_3 = arith.constant 0 : index
      %12 = vector.load %arg7[%c0, %c0_3] : memref<128x128xf32, #tpu.memory_space<vmem>>, vector<128x128xf32>
      tpu.vector_store %arg7[%c0, %c0_3], %11 {strides = array<i32>} : memref<128x128xf32, #tpu.memory_space<vmem>>, vector<128x128xf32>,
    } else {
    }
    %3 = arith.index_cast %arg0 : i32 to index
    %4 = memref.load %arg3[%3] : memref<2xi32, #tpu.memory_space<smem>>
    %5 = arith.cmpi slt, %arg1, %4 : i32
    %6 = arith.extui %5 : i1 to i32
    %c0_i32_1 = arith.constant 0 : i32
    %7 = arith.cmpi ne, %6, %c0_i32_1 : i32
    scf.if %7 {
      %c2_i32 = arith.constant 2 : i32
      %11 = arith.muli %arg0, %c2_i32 : i32
      %12 = arith.addi %11, %arg1 : i32
      %13 = arith.index_cast %12 : i32 to index
      %14 = memref.load %arg2[%13] : memref<4xi32, #tpu.memory_space<smem>>
      %c128_i32 = arith.constant 128 : i32
      %15 = arith.muli %14, %c128_i32 : i32
      %16 = tpu.assume_multiple %15, 128 : i32
      %17 = arith.index_cast %16 : i32 to index
      %c0 = arith.constant 0 : index
      %18 = vector.load %arg5[%17, %c0] : memref<256x128xbf16, #tpu.memory_space<vmem>>, vector<128x128xbf16>
      %c0_3 = arith.constant 0 : index
      %c0_4 = arith.constant 0 : index
      %19 = vector.load %arg7[%c0_3, %c0_4] : memref<128x128xf32, #tpu.memory_space<vmem>>, vector<128x128xf32>
      %c0_5 = arith.constant 0 : index
      %c0_6 = arith.constant 0 : index
      %20 = vector.load %arg4[%c0_5, %c0_6] : memref<128x128xbf16, #tpu.memory_space<vmem>>, vector<128x128xbf16>
      %cst = arith.constant dense<0.000000e+00> : vector<128x128xf32>
      %21 = tpu.matmul %20, %18, %cst {dimension_numbers = #tpu.dot_dimension_numbers<[1], [0], [0], [1], [0, 0, 1, 1], [], []>} : vector<128x128xbf16>, vector<128x128xbf16>, vector<128x128xf32> -> vector<128x128xf32>
      %22 = arith.addf %19, %21 : vector<128x128xf32>
      %c0_7 = arith.constant 0 : index
      %c0_8 = arith.constant 0 : index
      %23 = vector.load %arg7[%c0_7, %c0_8] : memref<128x128xf32, #tpu.memory_space<vmem>>, vector<128x128xf32>
      tpu.vector_store %arg7[%c0_7, %c0_8], %22 {strides = array<i32>} : memref<128x128xf32, #tpu.memory_space<vmem>>, vector<128x128xf32>,
    } else {
    }
    %c1_i32 = arith.constant 1 : i32
    %8 = arith.cmpi eq, %arg1, %c1_i32 : i32
    %9 = arith.extui %8 : i1 to i32
    %c0_i32_2 = arith.constant 0 : i32
    %10 = arith.cmpi ne, %9, %c0_i32_2 : i32
    scf.if %10 {
      %c0 = arith.constant 0 : index
      %c0_3 = arith.constant 0 : index
      %11 = vector.load %arg7[%c0, %c0_3] : memref<128x128xf32, #tpu.memory_space<vmem>>, vector<128x128xf32>
      %c0_4 = arith.constant 0 : index
      %c0_5 = arith.constant 0 : index
      %12 = vector.load %arg6[%c0_4, %c0_5] : memref<1x128xf32, #tpu.memory_space<vmem>>, vector<1x128xf32>
      %13 = vector.broadcast %12 : vector<1x128xf32> to vector<128x128xf32>
      %14 = arith.addf %11, %13 : vector<128x128xf32>
      %c0_6 = arith.constant 0 : index
      %c0_7 = arith.constant 0 : index
      %15 = vector.load %arg7[%c0_6, %c0_7] : memref<128x128xf32, #tpu.memory_space<vmem>>, vector<128x128xf32>
      tpu.vector_store %arg7[%c0_6, %c0_7], %14 {strides = array<i32>} : memref<128x128xf32, #tpu.memory_space<vmem>>, vector<128x128xf32>,
    } else {
    }
    return
  }
  func.func @transform_0(%arg0: i32, %arg1: i32, %arg2: memref<4xi32, #tpu.memory_space<smem>>, %arg3: memref<2xi32, #tpu.memory_space<smem>>) -> (i32, i32) {
    %c2_i32 = arith.constant 2 : i32
    %0 = arith.muli %arg0, %c2_i32 : i32
    %1 = arith.addi %0, %arg1 : i32
    %2 = arith.index_cast %1 : i32 to index
    %3 = memref.load %arg2[%2] : memref<4xi32, #tpu.memory_space<smem>>
    %c0_i32 = arith.constant 0 : i32
    return %arg0, %3 : i32, i32
  }
  func.func @transform_1(%arg0: i32, %arg1: i32, %arg2: memref<4xi32, #tpu.memory_space<smem>>, %arg3: memref<2xi32, #tpu.memory_space<smem>>) -> (i32, i32) {
    %c0_i32 = arith.constant 0 : i32
    %c0_i32_0 = arith.constant 0 : i32
    %c0_i32_1 = arith.constant 0 : i32
    return %c0_i32, %c0_i32_0 : i32, i32
  }
  func.func @transform_2(%arg0: i32, %arg1: i32, %arg2: memref<4xi32, #tpu.memory_space<smem>>, %arg3: memref<2xi32, #tpu.memory_space<smem>>) -> (i32, i32) {
    %c0_i32 = arith.constant 0 : i32
    %c0_i32_0 = arith.constant 0 : i32
    %c0_i32_1 = arith.constant 0 : i32
    return %c0_i32, %c0_i32_0 : i32, i32
  }
  func.func @transform_3(%arg0: i32, %arg1: i32, %arg2: memref<4xi32, #tpu.memory_space<smem>>, %arg3: memref<2xi32, #tpu.memory_space<smem>>) -> (i32, i32) {
    %c0_i32 = arith.constant 0 : i32
    %c0_i32_0 = arith.constant 0 : i32
    return %arg0, %c0_i32 : i32, i32
  }
}

module attributes {stable_mosaic.version = 11 : i64} {
  func.func @_support_kernel(%arg0: i32, %arg1: memref<128x32xbf16, #tpu.memory_space<vmem>>, %arg2: memref<32x128xbf16, #tpu.memory_space<vmem>>, %arg3: memref<128x128xbf16, #tpu.memory_space<vmem>>) attributes {dimension_semantics = [#tpu.dimension_semantics<parallel>], iteration_bounds = array<i64: 2>, scalar_prefetch = 0 : i64, scratch_operands = 0 : i64, tpu.core_type = #tpu.core_type<tc>, window_params = [{transform_indices = @transform_0, window_bounds = array<i64: 128, 32>}, {pipeline_mode = #tpu.pipeline_mode<synchronous>, transform_indices = @transform_1, window_bounds = array<i64: 32, 128>}, {transform_indices = @transform_2, window_bounds = array<i64: 128, 128>}]} {
    %c0 = arith.constant 0 : index
    %c0_0 = arith.constant 0 : index
    %0 = vector.load %arg1[%c0, %c0_0] : memref<128x32xbf16, #tpu.memory_space<vmem>>, vector<128x32xbf16>
    %c0_1 = arith.constant 0 : index
    %c0_2 = arith.constant 0 : index
    %1 = vector.load %arg2[%c0_1, %c0_2] : memref<32x128xbf16, #tpu.memory_space<vmem>>, vector<32x128xbf16>
    %cst = arith.constant dense<0.000000e+00> : vector<128x128xf32>
    %2 = tpu.matmul %0, %1, %cst {dimension_numbers = #tpu.dot_dimension_numbers<[1], [0], [0], [1], [0, 0, 1, 1], [], []>} : vector<128x32xbf16>, vector<32x128xbf16>, vector<128x128xf32> -> vector<128x128xf32>
    %3 = arith.truncf %2 : vector<128x128xf32> to vector<128x128xbf16>
    %c0_3 = arith.constant 0 : index
    %c0_4 = arith.constant 0 : index
    %4 = vector.load %arg3[%c0_3, %c0_4] : memref<128x128xbf16, #tpu.memory_space<vmem>>, vector<128x128xbf16>
    tpu.vector_store %arg3[%c0_3, %c0_4], %3 {strides = array<i32>} : memref<128x128xbf16, #tpu.memory_space<vmem>>, vector<128x128xbf16>,
    return
  }
  func.func @transform_0(%arg0: i32) -> (i32, i32) {
    %c0_i32 = arith.constant 0 : i32
    %c0_i32_0 = arith.constant 0 : i32
    return %arg0, %c0_i32 : i32, i32
  }
  func.func @transform_1(%arg0: i32) -> (i32, i32) {
    %c0_i32 = arith.constant 0 : i32
    %c0_i32_0 = arith.constant 0 : i32
    %c0_i32_1 = arith.constant 0 : i32
    return %c0_i32, %c0_i32_0 : i32, i32
  }
  func.func @transform_2(%arg0: i32) -> (i32, i32) {
    %c0_i32 = arith.constant 0 : i32
    %c0_i32_0 = arith.constant 0 : i32
    return %arg0, %c0_i32 : i32, i32
  }
}

</mosaic_0001>

<llo_original>
// kernel: _lambda_.2
$region0: #{_lambda_.2}
  #allocation0 [shape = 'u32[]', space=smem, size = 0x4, offset = 0x4, fixed_abs, tag = 'smem constant byte address 0x4 - core index']
  #allocation1 [shape = 'u32[144,128]{1,0:T(1,128)}', space=vmem, size = 0x12000, scoped, tag = 'internal scratch']
  %s0 = inlined_call_operand.vmem [shape: bf16[256,32], index: 0, kind: input, shape index: {}]
  %s1 = inlined_call_operand.vmem [shape: bf16[32,128], index: 1, kind: input, shape index: {}]
  %s2 = inlined_call_operand.vmem [shape: bf16[256,128], index: 2, kind: output, shape index: {}]
  %s3 = sld [smem:[#allocation0]]
  $region41: #{_lambda_.2} parent=0
    _
  %s5 = ssub.s32 1, %s3
  %s6 = scalar_select 0, %s5, %s3
  loop: start=0, step=1, limit=4
  $region2: #{_lambda_.2} parent=0 // loop_pre_header
    _
  $region3: #{_lambda_.2} parent=0 // loop_header
    %s8 = sphi 0, %s12
    %p9 = scmp.ge.s32.totalorder %s8, 4
    %s18 = sphi 0, %s20
    %s21 = sphi 0, %s18
    %s22 = sphi 0, %s21
    %s38 = sphi 0, %s22
    %s42 = sphi 0, %s42
    %s44 = sphi 0, %s42
    %s45 = sphi 0, %s44
    %s59 = sphi 0, %s45
    %s65 = sphi 0, %s67
    %s68 = sphi 0, %s65
    %s69 = sphi 0, %s68
    %s85 = sphi 0, %s69
  $region4: #{_lambda_.2} parent=0 // loop_header_branch
    %11 = sbr.rel (%p9) target = $region8
  $region5: #{_lambda_.2} parent=0 // loop_body
    %s13 = ssub.s32 %s8, 1
    %s14 = ssub.s32 %s8, 2
    %s15 = sadd.s32 %s8, 1
    %s16 = ssub.s32 %s8, %s15
    %p17 = scmp.eq.s32.totalorder %s16, 0
    %s19 = sadd.s32 %s18, 1
    %s20 = scalar_select %p17, %s18, %s19
    %p23 = pneg %p17
    %p24 = scmp.eq.s32.totalorder %s8, 1
    %p25 = por %p23, %p24
    %p26 = scmp.ne.s32.totalorder %s18, %s21
    %p27 = scmp.eq.s32.totalorder %s8, 0
    %p28 = por %p26, %p27
    %p29 = scmp.ne.s32.totalorder %s18, %s21
    %p30 = scmp.eq.s32.totalorder %s13, 1
    %p31 = por %p29, %p30
    %p32 = scmp.ne.s32.totalorder %s21, %s22
    %p33 = scmp.eq.s32.totalorder %s13, 0
    %p34 = por %p32, %p33
    %p35 = scmp.ne.s32.totalorder %s21, %s22
    %p36 = scmp.eq.s32.totalorder %s14, 1
    %p37 = por %p35, %p36
    %p39 = scmp.ne.s32.totalorder %s22, %s38
    %p40 = scmp.eq.s32.totalorder %s14, 0
    %p41 = por %p39, %p40
    %s43 = sadd.s32 %s42, 1
    %p46 = scmp.eq.s32.totalorder %s8, 1
    %p47 = scmp.ne.s32.totalorder %s42, %s44
    %p48 = scmp.eq.s32.totalorder %s8, 0
    %p49 = por %p47, %p48
    %p50 = scmp.ne.s32.totalorder %s42, %s44
    %p51 = scmp.eq.s32.totalorder %s13, 1
    %p52 = por %p50, %p51
    %p53 = scmp.ne.s32.totalorder %s44, %s45
    %p54 = scmp.eq.s32.totalorder %s13, 0
    %p55 = por %p53, %p54
    %p56 = scmp.ne.s32.totalorder %s44, %s45
    %p57 = scmp.eq.s32.totalorder %s14, 1
    %p58 = por %p56, %p57
    %p60 = scmp.ne.s32.totalorder %s45, %s59
    %p61 = scmp.eq.s32.totalorder %s14, 0
    %p62 = por %p60, %p61
    %s63 = ssub.s32 %s8, %s15
    %p64 = scmp.eq.s32.totalorder %s63, 0
    %s66 = sadd.s32 %s65, 1
    %s67 = scalar_select %p64, %s65, %s66
    %p70 = pneg %p64
    %p71 = scmp.eq.s32.totalorder %s8, 1
    %p72 = por %p70, %p71
    %p73 = scmp.ne.s32.totalorder %s65, %s68
    %p74 = scmp.eq.s32.totalorder %s8, 0
    %p75 = por %p73, %p74
    %p76 = scmp.ne.s32.totalorder %s65, %s68
    %p77 = scmp.eq.s32.totalorder %s13, 1
    %p78 = por %p76, %p77
    %p79 = scmp.ne.s32.totalorder %s68, %s69
    %p80 = scmp.eq.s32.totalorder %s13, 0
    %p81 = por %p79, %p80
    %p82 = scmp.ne.s32.totalorder %s68, %s69
    %p83 = scmp.eq.s32.totalorder %s14, 1
    %p84 = por %p82, %p83
    %p86 = scmp.ne.s32.totalorder %s69, %s85
    %p87 = scmp.eq.s32.totalorder %s14, 0
    %p88 = por %p86, %p87
    %p89 = scmp.le.s32.totalorder 1, %s8
    %p90 = scmp.lt.s32.totalorder %s8, 3
    %p91 = pnand %p89, %p90
    %p92 = pneg %p91
    // Predicated region
    $region9: #{_lambda_.2} parent=5 // pred_check
      _
    $region10: #{_lambda_.2} parent=5 // pred_check_branch
      %94 = sbr.rel (%p91) target = $region12
    $region11: #{_lambda_.2} parent=5 // pred_region
      %s95 = ssub.s32 %s8, 1
      // Predicated region
      $region13: #{_lambda_.2} parent=11 // pred_check
        %p96 = pneg %p55
      $region14: #{_lambda_.2} parent=11 // pred_check_branch
        %98 = sbr.rel (%p96) target = $region16
      $region15: #{_lambda_.2} parent=11 // pred_region
        _
      $region16: #{_lambda_.2} parent=11 // pred_fallthru
        _
    $region12: #{_lambda_.2} parent=5 // pred_fallthru
      _
    %p99 = scmp.lt.s32.totalorder %s8, 2
    // Predicated region
    $region17: #{_lambda_.2} parent=5 // pred_check
      %p100 = pneg %p99
    $region18: #{_lambda_.2} parent=5 // pred_check_branch
      %102 = sbr.rel (%p100) target = $region20
    $region19: #{_lambda_.2} parent=5 // pred_region
      // Predicated region
      $region21: #{_lambda_.2} parent=19 // pred_check
        %p103 = pneg %p28
      $region22: #{_lambda_.2} parent=19 // pred_check_branch
        %105 = sbr.rel (%p103) target = $region24
      $region23: #{_lambda_.2} parent=19 // pred_region
        %s106 = smul.u32 16, %s8
        %p107 = scmp.lt.s32.totalorder %s106, 31
        %s108 = scalar_select %p107, %s106, 31
        %s109 = smul.addr %s108, 4
        %s110 = scalar_lea.vmem %s0, %s109
        %s111 = smul.u32 16, %s8
      $region24: #{_lambda_.2} parent=19 // pred_fallthru
        _
    $region20: #{_lambda_.2} parent=5 // pred_fallthru
      _
    %p112 = scmp.le.s32.totalorder 1, %s8
    %p113 = scmp.lt.s32.totalorder %s8, 3
    %p114 = pnand %p112, %p113
    %p115 = pneg %p114
    // Predicated region
    $region25: #{_lambda_.2} parent=5 // pred_check
      _
    $region26: #{_lambda_.2} parent=5 // pred_check_branch
      %117 = sbr.rel (%p114) target = $region28
    $region27: #{_lambda_.2} parent=5 // pred_region
      %s118 = ssub.s32 %s8, 1
      %s119 = smul.u32 16, %s13
      %p120 = scmp.lt.s32.totalorder %s119, 31
      %s121 = scalar_select %p120, %s119, 31
      %s122 = smul.addr %s121, 4
      %s123 = scalar_lea.vmem %s0, %s122
      %p124 = pneg %p34
      %p125 = pneg %p31
      %p126 = pneg %p55
      %p127 = pneg %p52
      %p128 = pneg %p81
      %p129 = pneg %p78
      %s130 = smul.u32 16, %s13
      %p131 = scmp.lt.s32.totalorder %s130, 31
      %s132 = scalar_select %p131, %s130, 31
      %s133 = smul.addr %s132, 4
      %s134 = scalar_lea.vmem %s2, %s133
      %s135 = smul.u32 16, %s13
      %p136 = scmp.lt.s32.totalorder %s135, 31
      %s137 = scalar_select %p136, %s135, 31
      %s138 = smul.addr %s137, 4
      %s139 = scalar_lea.vmem %s0, %s138
      %s140 = smul.u32 16, %s13
      %s141 = smul.u32 16, %s13
      %p142 = scmp.lt.s32.totalorder %s141, 31
      %s143 = scalar_select %p142, %s141, 31
      %s144 = smul.addr %s143, 4
      %s145 = scalar_lea.vmem %s2, %s144
      %s146 = smul.u32 16, %s13
      %v148 = vld [vmem:[%s139] sm:$0xf]
      %v149 = vld [vmem:[%s139 + $0x4] sm:$0xf]
      %v150 = vld [vmem:[%s139 + $0x8] sm:$0xf]
      %v151 = vld [vmem:[%s139 + $0xc] sm:$0xf]
      %v152 = vld [vmem:[%s139 + $0x10] sm:$0xf]
      %v153 = vld [vmem:[%s139 + $0x14] sm:$0xf]
      %v154 = vld [vmem:[%s139 + $0x18] sm:$0xf]
      %v155 = vld [vmem:[%s139 + $0x1c] sm:$0xf]
      %v156 = vld [vmem:[%s139 + $0x20] sm:$0xf]
      %v157 = vld [vmem:[%s139 + $0x24] sm:$0xf]
      %v158 = vld [vmem:[%s139 + $0x28] sm:$0xf]
      %v159 = vld [vmem:[%s139 + $0x2c] sm:$0xf]
      %v160 = vld [vmem:[%s139 + $0x30] sm:$0xf]
      %v161 = vld [vmem:[%s139 + $0x34] sm:$0xf]
      %v162 = vld [vmem:[%s139 + $0x38] sm:$0xf]
      %v163 = vld [vmem:[%s139 + $0x3c] sm:$0xf]
      %v164 = vld [vmem:[%s1] sm:$0xf]
      %v165 = vld [vmem:[%s1 + $0x4] sm:$0xf]
      %v166 = vld [vmem:[%s1 + $0x8] sm:$0xf]
      %v167 = vld [vmem:[%s1 + $0xc] sm:$0xf]
      %v184 = vunpack.c.l.b16 %v148
      %v185 = vunpack.c.l.b16 %v149
      %v186 = vunpack.c.l.b16 %v150
      %v187 = vunpack.c.l.b16 %v151
      %v188 = vunpack.c.l.b16 %v152
      %v189 = vunpack.c.l.b16 %v153
      %v190 = vunpack.c.l.b16 %v154
      %v191 = vunpack.c.l.b16 %v155
      %v192 = vunpack.c.l.b16 %v156
      %v193 = vunpack.c.l.b16 %v157
      %v194 = vunpack.c.l.b16 %v158
      %v195 = vunpack.c.l.b16 %v159
      %v196 = vunpack.c.l.b16 %v160
      %v197 = vunpack.c.l.b16 %v161
      %v198 = vunpack.c.l.b16 %v162
      %v199 = vunpack.c.l.b16 %v163
      %v200 = vpack.c.b16 %v185, %v184
      %v201 = vpack.c.b16 %v187, %v186
      %v202 = vpack.c.b16 %v189, %v188
      %v203 = vpack.c.b16 %v191, %v190
      %v204 = vpack.c.b16 %v193, %v192
      %v205 = vpack.c.b16 %v195, %v194
      %v206 = vpack.c.b16 %v197, %v196
      %v207 = vpack.c.b16 %v199, %v198
      %v212 = vunpack.c.l.b16 %v164
      %v213 = vunpack.c.l.b16 %v165
      %v214 = vunpack.c.l.b16 %v166
      %v215 = vunpack.c.l.b16 %v167
      %v216 = vpack.c.b16 %v213, %v212
      %v217 = vpack.c.b16 %v215, %v214
      %vm220 = vcmask 261120
      %v222 = vsel %vm220, %v200, 0
      %v225 = vsel %vm220, %v201, 0
      %v228 = vsel %vm220, %v202, 0
      %v231 = vsel %vm220, %v203, 0
      %v234 = vsel %vm220, %v204, 0
      %v237 = vsel %vm220, %v205, 0
      %v240 = vsel %vm220, %v206, 0
      %v243 = vsel %vm220, %v207, 0
      %245 = vmatprep.subr.bf16.mxu0 0
      %246 = vmatpush1.bf16.msra.mxu0 %v216
      %247 = vmatprep.subr.bf16.mxu0 0
      %248 = vmatpush1.bf16.msra.mxu0 %v217
      %249 = vmatprep.subr.bf16.mxu0 0
      %250 = vmatpush1.bf16.msra.mxu0 0
      %251 = vmatprep.subr.bf16.mxu0 0
      %252 = vmatpush1.bf16.msra.mxu0 0
      %253 = vmatprep.subr.bf16.mxu0 0
      %254 = vmatpush1.bf16.msra.mxu0 0
      %255 = vmatprep.subr.bf16.mxu0 0
      %256 = vmatpush1.bf16.msra.mxu0 0
      %257 = vmatprep.subr.bf16.mxu0 0
      %258 = vmatpush1.bf16.msra.mxu0 0
      %259 = vmatprep.subr.bf16.mxu0 0
      %260 = vmatpush1.bf16.msra.mxu0 0
      %261 = vmatprep.subr.bf16.mxu0 0
      %262 = vmatpush1.bf16.msra.mxu0 0
      %263 = vmatprep.subr.bf16.mxu0 0
      %264 = vmatpush1.bf16.msra.mxu0 0
      %265 = vmatprep.subr.bf16.mxu0 0
      %266 = vmatpush1.bf16.msra.mxu0 0
      %267 = vmatprep.subr.bf16.mxu0 0
      %268 = vmatpush1.bf16.msra.mxu0 0
      %269 = vmatprep.subr.bf16.mxu0 0
      %270 = vmatpush1.bf16.msra.mxu0 0
      %271 = vmatprep.subr.bf16.mxu0 0
      %272 = vmatpush1.bf16.msra.mxu0 0
      %273 = vmatprep.subr.bf16.mxu0 0
      %274 = vmatpush1.bf16.msra.mxu0 0
      %275 = vmatprep.subr.bf16.mxu0 0
      %276 = vmatpush1.bf16.msra.mxu0 0
      %277 = vmatprep.mubr.bf16.mxu0 0
      %278 = vmatmul.mubr.bf16.gmra.mrb[0].mxu0 %v222
      %v279 = vpop.f32.mrb[0].mxu0
      %v280 = vadd.f32 0.0, %v279
      %v281 = vpop.f32.mrb[0].mxu0
      %v282 = vpop.f32.mrb[0].mxu0
      %v283 = vadd.f32 0.0, %v282
      %v284 = vpop.f32.mrb[0].mxu0
      %285 = vmatprep.mubr.bf16.mxu0 0
      %286 = vmatmul.mubr.bf16.gmra.mrb[0].mxu0 %v225
      %v287 = vpop.f32.mrb[0].mxu0
      %v288 = vadd.f32 0.0, %v287
      %v289 = vpop.f32.mrb[0].mxu0
      %v290 = vpop.f32.mrb[0].mxu0
      %v291 = vadd.f32 0.0, %v290
      %v292 = vpop.f32.mrb[0].mxu0
      %293 = vmatprep.mubr.bf16.mxu0 0
      %294 = vmatmul.mubr.bf16.gmra.mrb[0].mxu0 %v228
      %v295 = vpop.f32.mrb[0].mxu0
      %v296 = vadd.f32 0.0, %v295
      %v297 = vpop.f32.mrb[0].mxu0
      %v298 = vpop.f32.mrb[0].mxu0
      %v299 = vadd.f32 0.0, %v298
      %v300 = vpop.f32.mrb[0].mxu0
      %301 = vmatprep.mubr.bf16.mxu0 0
      %302 = vmatmul.mubr.bf16.gmra.mrb[0].mxu0 %v231
      %v303 = vpop.f32.mrb[0].mxu0
      %v304 = vadd.f32 0.0, %v303
      %v305 = vpop.f32.mrb[0].mxu0
      %v306 = vpop.f32.mrb[0].mxu0
      %v307 = vadd.f32 0.0, %v306
      %v308 = vpop.f32.mrb[0].mxu0
      %309 = vmatprep.mubr.bf16.mxu0 0
      %310 = vmatmul.mubr.bf16.gmra.mrb[0].mxu0 %v234
      %v311 = vpop.f32.mrb[0].mxu0
      %v312 = vadd.f32 0.0, %v311
      %v313 = vpop.f32.mrb[0].mxu0
      %v314 = vpop.f32.mrb[0].mxu0
      %v315 = vadd.f32 0.0, %v314
      %v316 = vpop.f32.mrb[0].mxu0
      %317 = vmatprep.mubr.bf16.mxu0 0
      %318 = vmatmul.mubr.bf16.gmra.mrb[0].mxu0 %v237
      %v319 = vpop.f32.mrb[0].mxu0
      %v320 = vadd.f32 0.0, %v319
      %v321 = vpop.f32.mrb[0].mxu0
      %v322 = vpop.f32.mrb[0].mxu0
      %v323 = vadd.f32 0.0, %v322
      %v324 = vpop.f32.mrb[0].mxu0
      %325 = vmatprep.mubr.bf16.mxu0 0
      %326 = vmatmul.mubr.bf16.gmra.mrb[0].mxu0 %v240
      %v327 = vpop.f32.mrb[0].mxu0
      %v328 = vadd.f32 0.0, %v327
      %v329 = vpop.f32.mrb[0].mxu0
      %v330 = vpop.f32.mrb[0].mxu0
      %v331 = vadd.f32 0.0, %v330
      %v332 = vpop.f32.mrb[0].mxu0
      %333 = vmatprep.mubr.bf16.mxu0 0
      %334 = vmatmul.mubr.bf16.gmra.mrb[0].mxu0 %v243
      %v335 = vpop.f32.mrb[0].mxu0
      %v336 = vadd.f32 0.0, %v335
      %v337 = vpop.f32.mrb[0].mxu0
      %v338 = vpop.f32.mrb[0].mxu0
      %v339 = vadd.f32 0.0, %v338
      %v340 = vpop.f32.mrb[0].mxu0
      %341 = vdwg.mxu0
      %v342 = vpack.c.bf16 %v283, %v280
      %v343 = vpack.c.bf16 %v291, %v288
      %v344 = vpack.c.bf16 %v299, %v296
      %v345 = vpack.c.bf16 %v307, %v304
      %v346 = vpack.c.bf16 %v315, %v312
      %v347 = vpack.c.bf16 %v323, %v320
      %v348 = vpack.c.bf16 %v331, %v328
      %v349 = vpack.c.bf16 %v339, %v336
      %v358 = vunpack.c.l.b16 %v342
      %v359 = vunpack.c.h.b16 %v342
      %v360 = vunpack.c.l.b16 %v343
      %v361 = vunpack.c.h.b16 %v343
      %v362 = vunpack.c.l.b16 %v344
      %v363 = vunpack.c.h.b16 %v344
      %v364 = vunpack.c.l.b16 %v345
      %v365 = vunpack.c.h.b16 %v345
      %v366 = vunpack.c.l.b16 %v346
      %v367 = vunpack.c.h.b16 %v346
      %v368 = vunpack.c.l.b16 %v347
      %v369 = vunpack.c.h.b16 %v347
      %v370 = vunpack.c.l.b16 %v348
      %v371 = vunpack.c.h.b16 %v348
      %v372 = vunpack.c.l.b16 %v349
      %v373 = vunpack.c.h.b16 %v349
      %v374 = vpack.c.b16 %v358, %v358
      %v375 = vpack.c.b16 %v359, %v359
      %v376 = vpack.c.b16 %v360, %v360
      %v377 = vpack.c.b16 %v361, %v361
      %v378 = vpack.c.b16 %v362, %v362
      %v379 = vpack.c.b16 %v363, %v363
      %v380 = vpack.c.b16 %v364, %v364
      %v381 = vpack.c.b16 %v365, %v365
      %v382 = vpack.c.b16 %v366, %v366
      %v383 = vpack.c.b16 %v367, %v367
      %v384 = vpack.c.b16 %v368, %v368
      %v385 = vpack.c.b16 %v369, %v369
      %v386 = vpack.c.b16 %v370, %v370
      %v387 = vpack.c.b16 %v371, %v371
      %v388 = vpack.c.b16 %v372, %v372
      %v389 = vpack.c.b16 %v373, %v373
      %406 = vst [vmem:[%s145] sm:$0xf] %v374
      %407 = vst [vmem:[%s145 + $0x4] sm:$0xf] %v375
      %408 = vst [vmem:[%s145 + $0x8] sm:$0xf] %v376
      %409 = vst [vmem:[%s145 + $0xc] sm:$0xf] %v377
      %410 = vst [vmem:[%s145 + $0x10] sm:$0xf] %v378
      %411 = vst [vmem:[%s145 + $0x14] sm:$0xf] %v379
      %412 = vst [vmem:[%s145 + $0x18] sm:$0xf] %v380
      %413 = vst [vmem:[%s145 + $0x1c] sm:$0xf] %v381
      %414 = vst [vmem:[%s145 + $0x20] sm:$0xf] %v382
      %415 = vst [vmem:[%s145 + $0x24] sm:$0xf] %v383
      %416 = vst [vmem:[%s145 + $0x28] sm:$0xf] %v384
      %417 = vst [vmem:[%s145 + $0x2c] sm:$0xf] %v385
      %418 = vst [vmem:[%s145 + $0x30] sm:$0xf] %v386
      %419 = vst [vmem:[%s145 + $0x34] sm:$0xf] %v387
      %420 = vst [vmem:[%s145 + $0x38] sm:$0xf] %v388
      %421 = vst [vmem:[%s145 + $0x3c] sm:$0xf] %v389
      %s422 = smul.u32 16, %s13
      %p423 = scmp.lt.s32.totalorder %s422, 31
      %s424 = scalar_select %p423, %s422, 31
      %s425 = smul.addr %s424, 4
      %s426 = scalar_lea.vmem %s2, %s425
      // Predicated region
      $region29: #{_lambda_.2} parent=27 // pred_check
        %p427 = pneg %p78
      $region30: #{_lambda_.2} parent=27 // pred_check_branch
        %429 = sbr.rel (%p427) target = $region32
      $region31: #{_lambda_.2} parent=27 // pred_region
        %s430 = smul.u32 16, %s13
      $region32: #{_lambda_.2} parent=27 // pred_fallthru
        _
    $region28: #{_lambda_.2} parent=5 // pred_fallthru
      _
    %p431 = scmp.le.s32.totalorder 2, %s8
    // Predicated region
    $region33: #{_lambda_.2} parent=5 // pred_check
      %p432 = pneg %p431
    $region34: #{_lambda_.2} parent=5 // pred_check_branch
      %434 = sbr.rel (%p432) target = $region36
    $region35: #{_lambda_.2} parent=5 // pred_region
      %s435 = ssub.s32 %s8, 2
      // Predicated region
      $region37: #{_lambda_.2} parent=35 // pred_check
        %p436 = pneg %p84
      $region38: #{_lambda_.2} parent=35 // pred_check_branch
        %438 = sbr.rel (%p436) target = $region40
      $region39: #{_lambda_.2} parent=35 // pred_region
        %s439 = smul.u32 16, %s14
        %p440 = scmp.lt.s32.totalorder %s439, 31
        %s441 = scalar_select %p440, %s439, 31
        %s442 = smul.addr %s441, 4
        %s443 = scalar_lea.vmem %s2, %s442
      $region40: #{_lambda_.2} parent=35 // pred_fallthru
        _
    $region36: #{_lambda_.2} parent=5 // pred_fallthru
      _
  $region6: #{_lambda_.2} parent=0 // loop_footer
    %s12 = sadd.s32 1, %s8
  $region7: #{_lambda_.2} parent=0 // loop_footer_branch
    %7 = sbr.rel target = $region3
  $region8: #{_lambda_.2} parent=0 // loop_exit
    _

// kernel: _lambda_.3
$region0: #{_lambda_.3}
  #allocation0 [shape = 'u32[]', space=smem, size = 0x4, offset = 0x4, fixed_abs, tag = 'smem constant byte address 0x4 - core index']
  #allocation1 [shape = 'u32[144,128]{1,0:T(1,128)}', space=vmem, size = 0x12000, scoped, tag = 'internal scratch']
  #allocation2 [shape = 's32[1]{0}', space=sflag, size = 0x4, scoped, tag = 'scoped memory for _lambda_.3']
  #allocation3 [shape = 'u8[512]{0}', space=smem, size = 0x200, scoped, tag = 'prefetched SMEM operand 0']
  #allocation4 [shape = 'u8[512]{0}', space=smem, size = 0x200, scoped, tag = 'prefetched SMEM operand 1']
  %s0 = inlined_call_operand.vmem [shape: s32[4], index: 0, kind: input, shape index: {}]
  %s1 = inlined_call_operand.vmem [shape: s32[2], index: 1, kind: input, shape index: {}]
  %s2 = inlined_call_operand.vmem [shape: bf16[256,256], index: 2, kind: input, shape index: {}]
  %s3 = inlined_call_operand.vmem [shape: bf16[256,128], index: 3, kind: input, shape index: {}]
  %s4 = inlined_call_operand.vmem [shape: f32[1,128], index: 4, kind: input, shape index: {}]
  %s5 = inlined_call_operand.vmem [shape: f32[256,128], index: 5, kind: output, shape index: {}]
  %s6 = sld [smem:[#allocation0]]
  $region98: #{_lambda_.3} parent=0
    _
  %s8 = ssub.s32 1, %s6
  %s9 = scalar_select 0, %s8, %s6
  %s10 = sshll.u32 %s0, 4
  %s11 = int_to_ptr.vmem [resolvable:$true] %s10
  %13 = dma.vmem_to_smem %s11, 16, [#allocation3], [#allocation2]
  %s14 = sshll.u32 %s1, 4
  %s15 = int_to_ptr.vmem [resolvable:$true] %s14
  %17 = dma.vmem_to_smem %s15, 16, [#allocation4], [#allocation2]
  %18 = dma.done [#allocation2], 32
  %19 = sfence
  $region1: #{_lambda_.3} parent=0
    #allocation5 [shape = 'u8[65536]{0}', space=vmem, size = 0x10000, scoped, tag = 'input window, operand 2']
    loop: start=0, step=1, limit=6
    $region2: #{_lambda_.3} parent=1 // loop_pre_header
      _
    $region3: #{_lambda_.3} parent=1 // loop_header
      %s21 = sphi 0, %s25
      %p22 = scmp.ge.s32.totalorder %s21, 6
      %s28 = sphi 0, %s40
      %s29 = sphi 0, %s36
      %s30 = sphi 0, %s28
      %s31 = sphi 0, %s29
      %s32 = sphi 0, %s30
      %s33 = sphi 0, %s31
      %s51 = sphi 0, %s53
      %s54 = sphi 0, %s51
      %s55 = sphi 0, %s54
      %s71 = sphi 0, %s55
      %s75 = sphi 0, %s75
      %s77 = sphi 0, %s75
      %s78 = sphi 0, %s77
      %s92 = sphi 0, %s78
      %s96 = sphi 0, %s96
      %s98 = sphi 0, %s96
      %s99 = sphi 0, %s98
      %s113 = sphi 0, %s99
      %s119 = sphi 0, %s121
      %s122 = sphi 0, %s119
      %s123 = sphi 0, %s122
      %s139 = sphi 0, %s123
    $region4: #{_lambda_.3} parent=1 // loop_header_branch
      %24 = sbr.rel (%p22) target = $region8
    $region5: #{_lambda_.3} parent=1 // loop_body
      %s26 = ssub.s32 %s21, 1
      %s27 = ssub.s32 %s21, 2
      %s34 = sadd.s32 1, %s29
      %p35 = scmp.ge.s32.totalorder %s34, 2
      %s36 = scalar_select %p35, 0, %s34
      %s37 = sadd.s32 1, %s28
      %s38 = scalar_select %p35, %s37, %s28
      %p39 = scmp.ge.s32.totalorder %s38, 2
      %s40 = scalar_select %p39, 0, %s38
      %s41 = smul.u32 %s28, 2
      %s42 = sadd.s32 %s41, %s29
      %s43 = sld [smem:[#allocation3 + %s42]]
      %s44 = smul.u32 %s40, 2
      %s45 = sadd.s32 %s44, %s36
      %s46 = sld [smem:[#allocation3 + %s45]]
      %s47 = ssub.s32 %s28, %s40
      %s48 = ssub.s32 %s43, %s46
      %s49 = sor.u32 %s47, %s48
      %p50 = scmp.eq.s32.totalorder %s49, 0
      %s52 = sadd.s32 %s51, 1
      %s53 = scalar_select %p50, %s51, %s52
      %p56 = pneg %p50
      %p57 = scmp.eq.s32.totalorder %s21, 3
      %p58 = por %p56, %p57
      %p59 = scmp.ne.s32.totalorder %s51, %s54
      %p60 = scmp.eq.s32.totalorder %s21, 0
      %p61 = por %p59, %p60
      %p62 = scmp.ne.s32.totalorder %s51, %s54
      %p63 = scmp.eq.s32.totalorder %s26, 3
      %p64 = por %p62, %p63
      %p65 = scmp.ne.s32.totalorder %s54, %s55
      %p66 = scmp.eq.s32.totalorder %s26, 0
      %p67 = por %p65, %p66
      %p68 = scmp.ne.s32.totalorder %s54, %s55
      %p69 = scmp.eq.s32.totalorder %s27, 3
      %p70 = por %p68, %p69
      %p72 = scmp.ne.s32.totalorder %s55, %s71
      %p73 = scmp.eq.s32.totalorder %s27, 0
      %p74 = por %p72, %p73
      %s76 = sadd.s32 %s75, 1
      %p79 = scmp.eq.s32.totalorder %s21, 3
      %p80 = scmp.ne.s32.totalorder %s75, %s77
      %p81 = scmp.eq.s32.totalorder %s21, 0
      %p82 = por %p80, %p81
      %p83 = scmp.ne.s32.totalorder %s75, %s77
      %p84 = scmp.eq.s32.totalorder %s26, 3
      %p85 = por %p83, %p84
      %p86 = scmp.ne.s32.totalorder %s77, %s78
      %p87 = scmp.eq.s32.totalorder %s26, 0
      %p88 = por %p86, %p87
      %p89 = scmp.ne.s32.totalorder %s77, %s78
      %p90 = scmp.eq.s32.totalorder %s27, 3
      %p91 = por %p89, %p90
      %p93 = scmp.ne.s32.totalorder %s78, %s92
      %p94 = scmp.eq.s32.totalorder %s27, 0
      %p95 = por %p93, %p94
      %s97 = sadd.s32 %s96, 1
      %p100 = scmp.eq.s32.totalorder %s21, 3
      %p101 = scmp.ne.s32.totalorder %s96, %s98
      %p102 = scmp.eq.s32.totalorder %s21, 0
      %p103 = por %p101, %p102
      %p104 = scmp.ne.s32.totalorder %s96, %s98
      %p105 = scmp.eq.s32.totalorder %s26, 3
      %p106 = por %p104, %p105
      %p107 = scmp.ne.s32.totalorder %s98, %s99
      %p108 = scmp.eq.s32.totalorder %s26, 0
      %p109 = por %p107, %p108
      %p110 = scmp.ne.s32.totalorder %s98, %s99
      %p111 = scmp.eq.s32.totalorder %s27, 3
      %p112 = por %p110, %p111
      %p114 = scmp.ne.s32.totalorder %s99, %s113
      %p115 = scmp.eq.s32.totalorder %s27, 0
      %p116 = por %p114, %p115
      %s117 = ssub.s32 %s28, %s40
      %p118 = scmp.eq.s32.totalorder %s117, 0
      %s120 = sadd.s32 %s119, 1
      %s121 = scalar_select %p118, %s119, %s120
      %p124 = pneg %p118
      %p125 = scmp.eq.s32.totalorder %s21, 3
      %p126 = por %p124, %p125
      %p127 = scmp.ne.s32.totalorder %s119, %s122
      %p128 = scmp.eq.s32.totalorder %s21, 0
      %p129 = por %p127, %p128
      %p130 = scmp.ne.s32.totalorder %s119, %s122
      %p131 = scmp.eq.s32.totalorder %s26, 3
      %p132 = por %p130, %p131
      %p133 = scmp.ne.s32.totalorder %s122, %s123
      %p134 = scmp.eq.s32.totalorder %s26, 0
      %p135 = por %p133, %p134
      %p136 = scmp.ne.s32.totalorder %s122, %s123
      %p137 = scmp.eq.s32.totalorder %s27, 3
      %p138 = por %p136, %p137
      %p140 = scmp.ne.s32.totalorder %s123, %s139
      %p141 = scmp.eq.s32.totalorder %s27, 0
      %p142 = por %p140, %p141
      %p143 = scmp.le.s32.totalorder 1, %s21
      %p144 = scmp.lt.s32.totalorder %s21, 5
      %p145 = pnand %p143, %p144
      %p146 = pneg %p145
      // Predicated region
      $region9: #{_lambda_.3} parent=5 // pred_check
        _
      $region10: #{_lambda_.3} parent=5 // pred_check_branch
        %148 = sbr.rel (%p145) target = $region12
      $region11: #{_lambda_.3} parent=5 // pred_region
        %s149 = ssub.s32 %s21, 1
        // Predicated region
        $region13: #{_lambda_.3} parent=11 // pred_check
          %p150 = pneg %p88
        $region14: #{_lambda_.3} parent=11 // pred_check_branch
          %152 = sbr.rel (%p150) target = $region16
        $region15: #{_lambda_.3} parent=11 // pred_region
          _
        $region16: #{_lambda_.3} parent=11 // pred_fallthru
          _
        // Predicated region
        $region17: #{_lambda_.3} parent=11 // pred_check
          %p153 = pneg %p109
        $region18: #{_lambda_.3} parent=11 // pred_check_branch
          %155 = sbr.rel (%p153) target = $region20
        $region19: #{_lambda_.3} parent=11 // pred_region
          _
        $region20: #{_lambda_.3} parent=11 // pred_fallthru
          _
      $region12: #{_lambda_.3} parent=5 // pred_fallthru
        _
      %p156 = scmp.lt.s32.totalorder %s21, 4
      // Predicated region
      $region21: #{_lambda_.3} parent=5 // pred_check
        %p157 = pneg %p156
      $region22: #{_lambda_.3} parent=5 // pred_check_branch
        %159 = sbr.rel (%p157) target = $region24
      $region23: #{_lambda_.3} parent=5 // pred_region
        // Predicated region
        $region25: #{_lambda_.3} parent=23 // pred_check
          %p160 = pneg %p61
        $region26: #{_lambda_.3} parent=23 // pred_check_branch
          %162 = sbr.rel (%p160) target = $region28
        $region27: #{_lambda_.3} parent=23 // pred_region
          %s163 = sand.u32 %s51, 1
          %s164 = sand.u32 %s51, 1
          %s165 = smul.addr %s164, 64
          %s166 = scalar_lea.vmem [#allocation5], %s165
          %s167 = smul.u32 %s28, 2
          %s168 = sadd.s32 %s167, %s29
          %s169 = sld [smem:[#allocation3 + %s168]]
          %s170 = smul.u32 16, %s28
          %s171 = smul.addr %s170, 2
          %s172 = sadd.s32 %s169, %s171
          %s173 = smul.addr %s172, 4
          %s174 = scalar_lea.vmem %s2, %s173
          // Predicated region
          $region29: #{_lambda_.3} parent=27 // pred_check
            _
          $region30: #{_lambda_.3} parent=27 // pred_check_branch
            %176 = sbr.rel (0) target = $region32
          $region31: #{_lambda_.3} parent=27 // pred_region
            // Predicated region
            $region33: #{_lambda_.3} parent=31 // pred_check
              _
            $region34: #{_lambda_.3} parent=31 // pred_check_branch
              %178 = sbr.rel target = $region36
            $region35: #{_lambda_.3} parent=31 // pred_region
              // Predicated region
              $region48: #{_lambda_.3} parent=35 // pred_check
                _
              $region49: #{_lambda_.3} parent=35 // pred_check_branch
                %223 = sbr.rel (0) target = $region51
              $region50: #{_lambda_.3} parent=35 // pred_region
                loop: start=0, step=1, limit=1
                $region52: #{_lambda_.3} parent=50 // loop_pre_header
                  _
                $region53: #{_lambda_.3} parent=50 // loop_header
                  %s225 = sphi 0, %s229
                  %p226 = scmp.ge.s32.totalorder %s225, 1
                  %s230 = sphi %s174, %s174
                  %s231 = sphi %s166, %s166
                $region54: #{_lambda_.3} parent=50 // loop_header_branch
                  %228 = sbr.rel (%p226) target = $region58
                $region55: #{_lambda_.3} parent=50 // loop_body
                  _
                $region56: #{_lambda_.3} parent=50 // loop_footer
                  %s229 = sadd.s32 1, %s225
                $region57: #{_lambda_.3} parent=50 // loop_footer_branch
                  %224 = sbr.rel target = $region53
                $region58: #{_lambda_.3} parent=50 // loop_exit
                  _
                loop: start=0, step=1, limit=1
                $region59: #{_lambda_.3} parent=50 // loop_pre_header
                  _
                $region60: #{_lambda_.3} parent=50 // loop_header
                  %s234 = sphi 0, %s238
                  %p235 = scmp.ge.s32.totalorder %s234, 1
                  %s239 = sphi %s174, %s174
                  %s240 = sphi %s166, %s166
                $region61: #{_lambda_.3} parent=50 // loop_header_branch
                  %237 = sbr.rel (%p235) target = $region65
                $region62: #{_lambda_.3} parent=50 // loop_body
                  %v241 = vld [vmem:[%s239] sm:$0xf]
                  %242 = vst [vmem:[%s240] sm:$0xf] %v241
                  %v243 = vld [vmem:[%s239 + $0x8] sm:$0xf]
                  %244 = vst [vmem:[%s240 + $0x4] sm:$0xf] %v243
                  %v245 = vld [vmem:[%s239 + $0x10] sm:$0xf]
                  %246 = vst [vmem:[%s240 + $0x8] sm:$0xf] %v245
                  %v247 = vld [vmem:[%s239 + $0x18] sm:$0xf]
                  %248 = vst [vmem:[%s240 + $0xc] sm:$0xf] %v247
                  %v249 = vld [vmem:[%s239 + $0x20] sm:$0xf]
                  %250 = vst [vmem:[%s240 + $0x10] sm:$0xf] %v249
                  %v251 = vld [vmem:[%s239 + $0x28] sm:$0xf]
                  %252 = vst [vmem:[%s240 + $0x14] sm:$0xf] %v251
                  %v253 = vld [vmem:[%s239 + $0x30] sm:$0xf]
                  %254 = vst [vmem:[%s240 + $0x18] sm:$0xf] %v253
                  %v255 = vld [vmem:[%s239 + $0x38] sm:$0xf]
                  %256 = vst [vmem:[%s240 + $0x1c] sm:$0xf] %v255
                  %v257 = vld [vmem:[%s239 + $0x40] sm:$0xf]
                  %258 = vst [vmem:[%s240 + $0x20] sm:$0xf] %v257
                  %v259 = vld [vmem:[%s239 + $0x48] sm:$0xf]
                  %260 = vst [vmem:[%s240 + $0x24] sm:$0xf] %v259
                  %v261 = vld [vmem:[%s239 + $0x50] sm:$0xf]
                  %262 = vst [vmem:[%s240 + $0x28] sm:$0xf] %v261
                  %v263 = vld [vmem:[%s239 + $0x58] sm:$0xf]
                  %264 = vst [vmem:[%s240 + $0x2c] sm:$0xf] %v263
                  %v265 = vld [vmem:[%s239 + $0x60] sm:$0xf]
                  %266 = vst [vmem:[%s240 + $0x30] sm:$0xf] %v265
                  %v267 = vld [vmem:[%s239 + $0x68] sm:$0xf]
                  %268 = vst [vmem:[%s240 + $0x34] sm:$0xf] %v267
                  %v269 = vld [vmem:[%s239 + $0x70] sm:$0xf]
                  %270 = vst [vmem:[%s240 + $0x38] sm:$0xf] %v269
                  %v271 = vld [vmem:[%s239 + $0x78] sm:$0xf]
                  %272 = vst [vmem:[%s240 + $0x3c] sm:$0xf] %v271
                $region63: #{_lambda_.3} parent=50 // loop_footer
                  %s238 = sadd.s32 1, %s234
                $region64: #{_lambda_.3} parent=50 // loop_footer_branch
                  %233 = sbr.rel target = $region60
                $region65: #{_lambda_.3} parent=50 // loop_exit
                  _
              $region51: #{_lambda_.3} parent=35 // pred_fallthru
                _
            $region36: #{_lambda_.3} parent=31 // pred_fallthru
              _
            // Predicated region
            $region37: #{_lambda_.3} parent=31 // pred_check
              _
            $region38: #{_lambda_.3} parent=31 // pred_check_branch
              %180 = sbr.rel (0) target = $region40
            $region39: #{_lambda_.3} parent=31 // pred_region
              loop: start=0, step=1, limit=1
              $region41: #{_lambda_.3} parent=39 // loop_pre_header
                _
              $region42: #{_lambda_.3} parent=39 // loop_header
                %s183 = sphi 0, %s187
                %p184 = scmp.ge.s32.totalorder %s183, 1
                %s188 = sphi %s174, %s174
                %s189 = sphi %s166, %s166
              $region43: #{_lambda_.3} parent=39 // loop_header_branch
                %186 = sbr.rel (%p184) target = $region47
              $region44: #{_lambda_.3} parent=39 // loop_body
                %v190 = vld [vmem:[%s188] sm:$0xf]
                %191 = vst [vmem:[%s189] sm:$0xf] %v190
                %v192 = vld [vmem:[%s188 + $0x8] sm:$0xf]
                %193 = vst [vmem:[%s189 + $0x4] sm:$0xf] %v192
                %v194 = vld [vmem:[%s188 + $0x10] sm:$0xf]
                %195 = vst [vmem:[%s189 + $0x8] sm:$0xf] %v194
                %v196 = vld [vmem:[%s188 + $0x18] sm:$0xf]
                %197 = vst [vmem:[%s189 + $0xc] sm:$0xf] %v196
                %v198 = vld [vmem:[%s188 + $0x20] sm:$0xf]
                %199 = vst [vmem:[%s189 + $0x10] sm:$0xf] %v198
                %v200 = vld [vmem:[%s188 + $0x28] sm:$0xf]
                %201 = vst [vmem:[%s189 + $0x14] sm:$0xf] %v200
                %v202 = vld [vmem:[%s188 + $0x30] sm:$0xf]
                %203 = vst [vmem:[%s189 + $0x18] sm:$0xf] %v202
                %v204 = vld [vmem:[%s188 + $0x38] sm:$0xf]
                %205 = vst [vmem:[%s189 + $0x1c] sm:$0xf] %v204
                %v206 = vld [vmem:[%s188 + $0x40] sm:$0xf]
                %207 = vst [vmem:[%s189 + $0x20] sm:$0xf] %v206
                %v208 = vld [vmem:[%s188 + $0x48] sm:$0xf]
                %209 = vst [vmem:[%s189 + $0x24] sm:$0xf] %v208
                %v210 = vld [vmem:[%s188 + $0x50] sm:$0xf]
                %211 = vst [vmem:[%s189 + $0x28] sm:$0xf] %v210
                %v212 = vld [vmem:[%s188 + $0x58] sm:$0xf]
                %213 = vst [vmem:[%s189 + $0x2c] sm:$0xf] %v212
                %v214 = vld [vmem:[%s188 + $0x60] sm:$0xf]
                %215 = vst [vmem:[%s189 + $0x30] sm:$0xf] %v214
                %v216 = vld [vmem:[%s188 + $0x68] sm:$0xf]
                %217 = vst [vmem:[%s189 + $0x34] sm:$0xf] %v216
                %v218 = vld [vmem:[%s188 + $0x70] sm:$0xf]
                %219 = vst [vmem:[%s189 + $0x38] sm:$0xf] %v218
                %v220 = vld [vmem:[%s188 + $0x78] sm:$0xf]
                %221 = vst [vmem:[%s189 + $0x3c] sm:$0xf] %v220
              $region45: #{_lambda_.3} parent=39 // loop_footer
                %s187 = sadd.s32 1, %s183
              $region46: #{_lambda_.3} parent=39 // loop_footer_branch
                %182 = sbr.rel target = $region42
              $region47: #{_lambda_.3} parent=39 // loop_exit
                _
            $region40: #{_lambda_.3} parent=31 // pred_fallthru
              _
          $region32: #{_lambda_.3} parent=27 // pred_fallthru
            _
          %273 = vnop
        $region28: #{_lambda_.3} parent=23 // pred_fallthru
          _
      $region24: #{_lambda_.3} parent=5 // pred_fallthru
        _
      %p274 = scmp.le.s32.totalorder 1, %s21
      %p275 = scmp.lt.s32.totalorder %s21, 5
      %p276 = pnand %p274, %p275
      %p277 = pneg %p276
      // Predicated region
      $region66: #{_lambda_.3} parent=5 // pred_check
        _
      $region67: #{_lambda_.3} parent=5 // pred_check_branch
        %279 = sbr.rel (%p276) target = $region69
      $region68: #{_lambda_.3} parent=5 // pred_region
        %s280 = ssub.s32 %s21, 1
        %s281 = sand.u32 %s54, 1
        %s282 = sand.u32 %s54, 1
        %s283 = smul.addr %s282, 64
        %s284 = scalar_lea.vmem [#allocation5], %s283
        // Predicated region
        $region70: #{_lambda_.3} parent=68 // pred_check
          %p285 = pneg %p67
        $region71: #{_lambda_.3} parent=68 // pred_check_branch
          %287 = sbr.rel (%p285) target = $region73
        $region72: #{_lambda_.3} parent=68 // pred_region
          _
        $region73: #{_lambda_.3} parent=68 // pred_fallthru
          _
        %s288 = sand.u32 %s54, 1
        %s289 = sand.u32 %s54, 1
        %s290 = smul.addr %s289, 64
        %s291 = scalar_lea.vmem [#allocation5], %s290
        %p292 = pneg %p67
        %p293 = pneg %p64
        %p294 = pneg %p88
        %p295 = pneg %p85
        %p296 = pneg %p109
        %p297 = pneg %p106
        %p298 = pneg %p135
        %p299 = pneg %p132
        %s300 = smul.u32 16, %s30
        %p301 = scmp.lt.s32.totalorder %s300, 31
        %s302 = scalar_select %p301, %s300, 31
        %s303 = smul.addr %s302, 8
        %s304 = scalar_lea.vmem %s5, %s303
        %s305 = smul.u32 %s30, 2
        %s306 = sadd.s32 %s305, %s31
        %s307 = sld [smem:[#allocation3 + %s306]]
        %s308 = smul.u32 16, %s30
        %s309 = smul.u32 16, %s30
        %p310 = scmp.lt.s32.totalorder %s309, 31
        %s311 = scalar_select %p310, %s309, 31
        %s312 = smul.addr %s311, 8
        %s313 = scalar_lea.vmem %s5, %s312
        %s314 = smul.u32 16, %s30
        %p316 = scmp.eq.s32.totalorder %s31, 0
        // Predicated region
        $region74: #{_lambda_.3} parent=68 // pred_check
          %p317 = pneg %p316
        $region75: #{_lambda_.3} parent=68 // pred_check_branch
          %319 = sbr.rel (%p317) target = $region77
        $region76: #{_lambda_.3} parent=68 // pred_region
          %320 = vst [vmem:[%s313] sm:$0xff] 0.0
          %321 = vst [vmem:[%s313 + $0x8] sm:$0xff] 0.0
          %322 = vst [vmem:[%s313 + $0x10] sm:$0xff] 0.0
          %323 = vst [vmem:[%s313 + $0x18] sm:$0xff] 0.0
          %324 = vst [vmem:[%s313 + $0x20] sm:$0xff] 0.0
          %325 = vst [vmem:[%s313 + $0x28] sm:$0xff] 0.0
          %326 = vst [vmem:[%s313 + $0x30] sm:$0xff] 0.0
          %327 = vst [vmem:[%s313 + $0x38] sm:$0xff] 0.0
          %328 = vst [vmem:[%s313 + $0x40] sm:$0xff] 0.0
          %329 = vst [vmem:[%s313 + $0x48] sm:$0xff] 0.0
          %330 = vst [vmem:[%s313 + $0x50] sm:$0xff] 0.0
          %331 = vst [vmem:[%s313 + $0x58] sm:$0xff] 0.0
          %332 = vst [vmem:[%s313 + $0x60] sm:$0xff] 0.0
          %333 = vst [vmem:[%s313 + $0x68] sm:$0xff] 0.0
          %334 = vst [vmem:[%s313 + $0x70] sm:$0xff] 0.0
          %335 = vst [vmem:[%s313 + $0x78] sm:$0xff] 0.0
        $region77: #{_lambda_.3} parent=68 // pred_fallthru
          _
        %s336 = sld [smem:[#allocation4 + %s30]]
        %p337 = scmp.lt.s32.totalorder %s31, %s336
        // Predicated region
        $region78: #{_lambda_.3} parent=68 // pred_check
          %p338 = pneg %p337
        $region79: #{_lambda_.3} parent=68 // pred_check_branch
          %340 = sbr.rel (%p338) target = $region81
        $region80: #{_lambda_.3} parent=68 // pred_region
          %s341 = smul.u32 %s30, 2
          %s342 = sadd.s32 %s341, %s31
          %s343 = sld [smem:[#allocation3 + %s342]]
          %s344 = smul.u32 %s343, 128
          %s345 = sshra.s32 %s344, 3
          %s346 = sand.u32 %s344, 7
          %s347 = smul.addr %s345, 4
          %s348 = scalar_lea.vmem %s3, %s347
          %v349 = vld [vmem:[%s348] sm:$0xf]
          %v350 = vld [vmem:[%s348 + $0x4] sm:$0xf]
          %v351 = vld [vmem:[%s348 + $0x8] sm:$0xf]
          %v352 = vld [vmem:[%s348 + $0xc] sm:$0xf]
          %v353 = vld [vmem:[%s348 + $0x10] sm:$0xf]
          %v354 = vld [vmem:[%s348 + $0x14] sm:$0xf]
          %v355 = vld [vmem:[%s348 + $0x18] sm:$0xf]
          %v356 = vld [vmem:[%s348 + $0x1c] sm:$0xf]
          %v357 = vld [vmem:[%s348 + $0x20] sm:$0xf]
          %v358 = vld [vmem:[%s348 + $0x24] sm:$0xf]
          %v359 = vld [vmem:[%s348 + $0x28] sm:$0xf]
          %v360 = vld [vmem:[%s348 + $0x2c] sm:$0xf]
          %v361 = vld [vmem:[%s348 + $0x30] sm:$0xf]
          %v362 = vld [vmem:[%s348 + $0x34] sm:$0xf]
          %v363 = vld [vmem:[%s348 + $0x38] sm:$0xf]
          %v364 = vld [vmem:[%s348 + $0x3c] sm:$0xf]
          %v365 = vld [vmem:[%s313] sm:$0xff]
          %v366 = vld [vmem:[%s313 + $0x8] sm:$0xff]
          %v367 = vld [vmem:[%s313 + $0x10] sm:$0xff]
          %v368 = vld [vmem:[%s313 + $0x18] sm:$0xff]
          %v369 = vld [vmem:[%s313 + $0x20] sm:$0xff]
          %v370 = vld [vmem:[%s313 + $0x28] sm:$0xff]
          %v371 = vld [vmem:[%s313 + $0x30] sm:$0xff]
          %v372 = vld [vmem:[%s313 + $0x38] sm:$0xff]
          %v373 = vld [vmem:[%s313 + $0x40] sm:$0xff]
          %v374 = vld [vmem:[%s313 + $0x48] sm:$0xff]
          %v375 = vld [vmem:[%s313 + $0x50] sm:$0xff]
          %v376 = vld [vmem:[%s313 + $0x58] sm:$0xff]
          %v377 = vld [vmem:[%s313 + $0x60] sm:$0xff]
          %v378 = vld [vmem:[%s313 + $0x68] sm:$0xff]
          %v379 = vld [vmem:[%s313 + $0x70] sm:$0xff]
          %v380 = vld [vmem:[%s313 + $0x78] sm:$0xff]
          %v381 = vld [vmem:[%s284] sm:$0xf]
          %v382 = vld [vmem:[%s284 + $0x4] sm:$0xf]
          %v383 = vld [vmem:[%s284 + $0x8] sm:$0xf]
          %v384 = vld [vmem:[%s284 + $0xc] sm:$0xf]
          %v385 = vld [vmem:[%s284 + $0x10] sm:$0xf]
          %v386 = vld [vmem:[%s284 + $0x14] sm:$0xf]
          %v387 = vld [vmem:[%s284 + $0x18] sm:$0xf]
          %v388 = vld [vmem:[%s284 + $0x1c] sm:$0xf]
          %v389 = vld [vmem:[%s284 + $0x20] sm:$0xf]
          %v390 = vld [vmem:[%s284 + $0x24] sm:$0xf]
          %v391 = vld [vmem:[%s284 + $0x28] sm:$0xf]
          %v392 = vld [vmem:[%s284 + $0x2c] sm:$0xf]
          %v393 = vld [vmem:[%s284 + $0x30] sm:$0xf]
          %v394 = vld [vmem:[%s284 + $0x34] sm:$0xf]
          %v395 = vld [vmem:[%s284 + $0x38] sm:$0xf]
          %v396 = vld [vmem:[%s284 + $0x3c] sm:$0xf]
          %v413 = vunpack.c.l.b16 %v381
          %v414 = vunpack.c.l.b16 %v382
          %v415 = vunpack.c.l.b16 %v383
          %v416 = vunpack.c.l.b16 %v384
          %v417 = vunpack.c.l.b16 %v385
          %v418 = vunpack.c.l.b16 %v386
          %v419 = vunpack.c.l.b16 %v387
          %v420 = vunpack.c.l.b16 %v388
          %v421 = vunpack.c.l.b16 %v389
          %v422 = vunpack.c.l.b16 %v390
          %v423 = vunpack.c.l.b16 %v391
          %v424 = vunpack.c.l.b16 %v392
          %v425 = vunpack.c.l.b16 %v393
          %v426 = vunpack.c.l.b16 %v394
          %v427 = vunpack.c.l.b16 %v395
          %v428 = vunpack.c.l.b16 %v396
          %v429 = vpack.c.b16 %v414, %v413
          %v430 = vpack.c.b16 %v416, %v415
          %v431 = vpack.c.b16 %v418, %v417
          %v432 = vpack.c.b16 %v420, %v419
          %v433 = vpack.c.b16 %v422, %v421
          %v434 = vpack.c.b16 %v424, %v423
          %v435 = vpack.c.b16 %v426, %v425
          %v436 = vpack.c.b16 %v428, %v427
          %v461 = vunpack.c.l.b16 %v349
          %v462 = vunpack.c.l.b16 %v350
          %v463 = vunpack.c.l.b16 %v351
          %v464 = vunpack.c.l.b16 %v352
          %v465 = vunpack.c.l.b16 %v353
          %v466 = vunpack.c.l.b16 %v354
          %v467 = vunpack.c.l.b16 %v355
          %v468 = vunpack.c.l.b16 %v356
          %v469 = vunpack.c.l.b16 %v357
          %v470 = vunpack.c.l.b16 %v358
          %v471 = vunpack.c.l.b16 %v359
          %v472 = vunpack.c.l.b16 %v360
          %v473 = vunpack.c.l.b16 %v361
          %v474 = vunpack.c.l.b16 %v362
          %v475 = vunpack.c.l.b16 %v363
          %v476 = vunpack.c.l.b16 %v364
          %v477 = vpack.c.b16 %v462, %v461
          %v478 = vpack.c.b16 %v464, %v463
          %v479 = vpack.c.b16 %v466, %v465
          %v480 = vpack.c.b16 %v468, %v467
          %v481 = vpack.c.b16 %v470, %v469
          %v482 = vpack.c.b16 %v472, %v471
          %v483 = vpack.c.b16 %v474, %v473
          %v484 = vpack.c.b16 %v476, %v475
          %493 = vmatprep.subr.bf16.mxu0 0
          %494 = vmatpush1.bf16.msra.mxu0 %v477
          %495 = vmatprep.subr.bf16.mxu0 0
          %496 = vmatpush1.bf16.msra.mxu0 %v478
          %497 = vmatprep.subr.bf16.mxu0 0
          %498 = vmatpush1.bf16.msra.mxu0 %v479
          %499 = vmatprep.subr.bf16.mxu0 0
          %500 = vmatpush1.bf16.msra.mxu0 %v480
          %501 = vmatprep.subr.bf16.mxu0 0
          %502 = vmatpush1.bf16.msra.mxu0 %v481
          %503 = vmatprep.subr.bf16.mxu0 0
          %504 = vmatpush1.bf16.msra.mxu0 %v482
          %505 = vmatprep.subr.bf16.mxu0 0
          %506 = vmatpush1.bf16.msra.mxu0 %v483
          %507 = vmatprep.subr.bf16.mxu0 0
          %508 = vmatpush1.bf16.msra.mxu0 %v484
          %509 = vmatprep.subr.bf16.mxu0 0
          %510 = vmatpush1.bf16.msra.mxu0 0
          %511 = vmatprep.subr.bf16.mxu0 0
          %512 = vmatpush1.bf16.msra.mxu0 0
          %513 = vmatprep.subr.bf16.mxu0 0
          %514 = vmatpush1.bf16.msra.mxu0 0
          %515 = vmatprep.subr.bf16.mxu0 0
          %516 = vmatpush1.bf16.msra.mxu0 0
          %517 = vmatprep.subr.bf16.mxu0 0
          %518 = vmatpush1.bf16.msra.mxu0 0
          %519 = vmatprep.subr.bf16.mxu0 0
          %520 = vmatpush1.bf16.msra.mxu0 0
          %521 = vmatprep.subr.bf16.mxu0 0
          %522 = vmatpush1.bf16.msra.mxu0 0
          %523 = vmatprep.subr.bf16.mxu0 0
          %524 = vmatpush1.bf16.msra.mxu0 0
          %525 = vmatprep.mubr.bf16.mxu0 0
          %526 = vmatmul.mubr.bf16.gmra.mrb[0].mxu0 %v429
          %v527 = vpop.f32.mrb[0].mxu0
          %v528 = vadd.f32 0.0, %v527
          %v529 = vpop.f32.mrb[0].mxu0
          %v530 = vpop.f32.mrb[0].mxu0
          %v531 = vadd.f32 0.0, %v530
          %v532 = vpop.f32.mrb[0].mxu0
          %533 = vmatprep.mubr.bf16.mxu0 0
          %534 = vmatmul.mubr.bf16.gmra.mrb[0].mxu0 %v430
          %v535 = vpop.f32.mrb[0].mxu0
          %v536 = vadd.f32 0.0, %v535
          %v537 = vpop.f32.mrb[0].mxu0
          %v538 = vpop.f32.mrb[0].mxu0
          %v539 = vadd.f32 0.0, %v538
          %v540 = vpop.f32.mrb[0].mxu0
          %541 = vmatprep.mubr.bf16.mxu0 0
          %542 = vmatmul.mubr.bf16.gmra.mrb[0].mxu0 %v431
          %v543 = vpop.f32.mrb[0].mxu0
          %v544 = vadd.f32 0.0, %v543
          %v545 = vpop.f32.mrb[0].mxu0
          %v546 = vpop.f32.mrb[0].mxu0
          %v547 = vadd.f32 0.0, %v546
          %v548 = vpop.f32.mrb[0].mxu0
          %549 = vmatprep.mubr.bf16.mxu0 0
          %550 = vmatmul.mubr.bf16.gmra.mrb[0].mxu0 %v432
          %v551 = vpop.f32.mrb[0].mxu0
          %v552 = vadd.f32 0.0, %v551
          %v553 = vpop.f32.mrb[0].mxu0
          %v554 = vpop.f32.mrb[0].mxu0
          %v555 = vadd.f32 0.0, %v554
          %v556 = vpop.f32.mrb[0].mxu0
          %557 = vmatprep.mubr.bf16.mxu0 0
          %558 = vmatmul.mubr.bf16.gmra.mrb[0].mxu0 %v433
          %v559 = vpop.f32.mrb[0].mxu0
          %v560 = vadd.f32 0.0, %v559
          %v561 = vpop.f32.mrb[0].mxu0
          %v562 = vpop.f32.mrb[0].mxu0
          %v563 = vadd.f32 0.0, %v562
          %v564 = vpop.f32.mrb[0].mxu0
          %565 = vmatprep.mubr.bf16.mxu0 0
          %566 = vmatmul.mubr.bf16.gmra.mrb[0].mxu0 %v434
          %v567 = vpop.f32.mrb[0].mxu0
          %v568 = vadd.f32 0.0, %v567
          %v569 = vpop.f32.mrb[0].mxu0
          %v570 = vpop.f32.mrb[0].mxu0
          %v571 = vadd.f32 0.0, %v570
          %v572 = vpop.f32.mrb[0].mxu0
          %573 = vmatprep.mubr.bf16.mxu0 0
          %574 = vmatmul.mubr.bf16.gmra.mrb[0].mxu0 %v435
          %v575 = vpop.f32.mrb[0].mxu0
          %v576 = vadd.f32 0.0, %v575
          %v577 = vpop.f32.mrb[0].mxu0
          %v578 = vpop.f32.mrb[0].mxu0
          %v579 = vadd.f32 0.0, %v578
          %v580 = vpop.f32.mrb[0].mxu0
          %581 = vmatprep.mubr.bf16.mxu0 0
          %582 = vmatmul.mubr.bf16.gmra.mrb[0].mxu0 %v436
          %v583 = vpop.f32.mrb[0].mxu0
          %v584 = vadd.f32 0.0, %v583
          %v585 = vpop.f32.mrb[0].mxu0
          %v586 = vpop.f32.mrb[0].mxu0
          %v587 = vadd.f32 0.0, %v586
          %v588 = vpop.f32.mrb[0].mxu0
          %589 = vdwg.mxu0
          %v590 = vadd.f32 %v365, %v528
          %v591 = vadd.f32 %v366, %v531
          %v592 = vadd.f32 %v367, %v536
          %v593 = vadd.f32 %v368, %v539
          %v594 = vadd.f32 %v369, %v544
          %v595 = vadd.f32 %v370, %v547
          %v596 = vadd.f32 %v371, %v552
          %v597 = vadd.f32 %v372, %v555
          %v598 = vadd.f32 %v373, %v560
          %v599 = vadd.f32 %v374, %v563
          %v600 = vadd.f32 %v375, %v568
          %v601 = vadd.f32 %v376, %v571
          %v602 = vadd.f32 %v377, %v576
          %v603 = vadd.f32 %v378, %v579
          %v604 = vadd.f32 %v379, %v584
          %v605 = vadd.f32 %v380, %v587
          %606 = vst [vmem:[%s313] sm:$0xff] %v590
          %607 = vst [vmem:[%s313 + $0x8] sm:$0xff] %v591
          %608 = vst [vmem:[%s313 + $0x10] sm:$0xff] %v592
          %609 = vst [vmem:[%s313 + $0x18] sm:$0xff] %v593
          %610 = vst [vmem:[%s313 + $0x20] sm:$0xff] %v594
          %611 = vst [vmem:[%s313 + $0x28] sm:$0xff] %v595
          %612 = vst [vmem:[%s313 + $0x30] sm:$0xff] %v596
          %613 = vst [vmem:[%s313 + $0x38] sm:$0xff] %v597
          %614 = vst [vmem:[%s313 + $0x40] sm:$0xff] %v598
          %615 = vst [vmem:[%s313 + $0x48] sm:$0xff] %v599
          %616 = vst [vmem:[%s313 + $0x50] sm:$0xff] %v600
          %617 = vst [vmem:[%s313 + $0x58] sm:$0xff] %v601
          %618 = vst [vmem:[%s313 + $0x60] sm:$0xff] %v602
          %619 = vst [vmem:[%s313 + $0x68] sm:$0xff] %v603
          %620 = vst [vmem:[%s313 + $0x70] sm:$0xff] %v604
          %621 = vst [vmem:[%s313 + $0x78] sm:$0xff] %v605
        $region81: #{_lambda_.3} parent=68 // pred_fallthru
          _
        %p622 = scmp.eq.s32.totalorder %s31, 1
        // Predicated region
        $region82: #{_lambda_.3} parent=68 // pred_check
          %p623 = pneg %p622
        $region83: #{_lambda_.3} parent=68 // pred_check_branch
          %625 = sbr.rel (%p623) target = $region85
        $region84: #{_lambda_.3} parent=68 // pred_region
          %v626 = vld [vmem:[%s313] sm:$0xff]
          %v627 = vld [vmem:[%s313 + $0x8] sm:$0xff]
          %v628 = vld [vmem:[%s313 + $0x10] sm:$0xff]
          %v629 = vld [vmem:[%s313 + $0x18] sm:$0xff]
          %v630 = vld [vmem:[%s313 + $0x20] sm:$0xff]
          %v631 = vld [vmem:[%s313 + $0x28] sm:$0xff]
          %v632 = vld [vmem:[%s313 + $0x30] sm:$0xff]
          %v633 = vld [vmem:[%s313 + $0x38] sm:$0xff]
          %v634 = vld [vmem:[%s313 + $0x40] sm:$0xff]
          %v635 = vld [vmem:[%s313 + $0x48] sm:$0xff]
          %v636 = vld [vmem:[%s313 + $0x50] sm:$0xff]
          %v637 = vld [vmem:[%s313 + $0x58] sm:$0xff]
          %v638 = vld [vmem:[%s313 + $0x60] sm:$0xff]
          %v639 = vld [vmem:[%s313 + $0x68] sm:$0xff]
          %v640 = vld [vmem:[%s313 + $0x70] sm:$0xff]
          %v641 = vld [vmem:[%s313 + $0x78] sm:$0xff]
          %v642 = vld [vmem:[%s4] sm:$0x1]
          %v644 = vlaneseq
          %v645 = vshrl.u32 %v644, 7
          %v646 = vsub.s32 0, %v645
          %v647 = vrot.slane %v642, %v646
          %v649 = vadd.f32 %v626, %v647
          %v650 = vadd.f32 %v627, %v647
          %v651 = vadd.f32 %v628, %v647
          %v652 = vadd.f32 %v629, %v647
          %v653 = vadd.f32 %v630, %v647
          %v654 = vadd.f32 %v631, %v647
          %v655 = vadd.f32 %v632, %v647
          %v656 = vadd.f32 %v633, %v647
          %v657 = vadd.f32 %v634, %v647
          %v658 = vadd.f32 %v635, %v647
          %v659 = vadd.f32 %v636, %v647
          %v660 = vadd.f32 %v637, %v647
          %v661 = vadd.f32 %v638, %v647
          %v662 = vadd.f32 %v639, %v647
          %v663 = vadd.f32 %v640, %v647
          %v664 = vadd.f32 %v641, %v647
          %665 = vst [vmem:[%s313] sm:$0xff] %v649
          %666 = vst [vmem:[%s313 + $0x8] sm:$0xff] %v650
          %667 = vst [vmem:[%s313 + $0x10] sm:$0xff] %v651
          %668 = vst [vmem:[%s313 + $0x18] sm:$0xff] %v652
          %669 = vst [vmem:[%s313 + $0x20] sm:$0xff] %v653
          %670 = vst [vmem:[%s313 + $0x28] sm:$0xff] %v654
          %671 = vst [vmem:[%s313 + $0x30] sm:$0xff] %v655
          %672 = vst [vmem:[%s313 + $0x38] sm:$0xff] %v656
          %673 = vst [vmem:[%s313 + $0x40] sm:$0xff] %v657
          %674 = vst [vmem:[%s313 + $0x48] sm:$0xff] %v658
          %675 = vst [vmem:[%s313 + $0x50] sm:$0xff] %v659
          %676 = vst [vmem:[%s313 + $0x58] sm:$0xff] %v660
          %677 = vst [vmem:[%s313 + $0x60] sm:$0xff] %v661
          %678 = vst [vmem:[%s313 + $0x68] sm:$0xff] %v662
          %679 = vst [vmem:[%s313 + $0x70] sm:$0xff] %v663
          %680 = vst [vmem:[%s313 + $0x78] sm:$0xff] %v664
        $region85: #{_lambda_.3} parent=68 // pred_fallthru
          _
        %s681 = smul.u32 16, %s30
        %p682 = scmp.lt.s32.totalorder %s681, 31
        %s683 = scalar_select %p682, %s681, 31
        %s684 = smul.addr %s683, 8
        %s685 = scalar_lea.vmem %s5, %s684
        // Predicated region
        $region86: #{_lambda_.3} parent=68 // pred_check
          %p686 = pneg %p132
        $region87: #{_lambda_.3} parent=68 // pred_check_branch
          %688 = sbr.rel (%p686) target = $region89
        $region88: #{_lambda_.3} parent=68 // pred_region
          %s689 = smul.u32 16, %s30
        $region89: #{_lambda_.3} parent=68 // pred_fallthru
          _
      $region69: #{_lambda_.3} parent=5 // pred_fallthru
        _
      %p690 = scmp.le.s32.totalorder 2, %s21
      // Predicated region
      $region90: #{_lambda_.3} parent=5 // pred_check
        %p691 = pneg %p690
      $region91: #{_lambda_.3} parent=5 // pred_check_branch
        %693 = sbr.rel (%p691) target = $region93
      $region92: #{_lambda_.3} parent=5 // pred_region
        %s694 = ssub.s32 %s21, 2
        // Predicated region
        $region94: #{_lambda_.3} parent=92 // pred_check
          %p695 = pneg %p138
        $region95: #{_lambda_.3} parent=92 // pred_check_branch
          %697 = sbr.rel (%p695) target = $region97
        $region96: #{_lambda_.3} parent=92 // pred_region
          %s698 = smul.u32 16, %s32
          %p699 = scmp.lt.s32.totalorder %s698, 31
          %s700 = scalar_select %p699, %s698, 31
          %s701 = smul.addr %s700, 8
          %s702 = scalar_lea.vmem %s5, %s701
        $region97: #{_lambda_.3} parent=92 // pred_fallthru
          _
      $region93: #{_lambda_.3} parent=5 // pred_fallthru
        _
    $region6: #{_lambda_.3} parent=1 // loop_footer
      %s25 = sadd.s32 1, %s21
    $region7: #{_lambda_.3} parent=1 // loop_footer_branch
      %20 = sbr.rel target = $region3
    $region8: #{_lambda_.3} parent=1 // loop_exit
      _

</llo_original>
